<compile_context>
chip_gen: v5e
topology: v5e:2x2
jax: 0.10.0
libtpu: 0.0.40
codegen_flags: <defaults>
</compile_context>

<pallas_src>
import functools

import jax
import jax.numpy as jnp
import numpy as np
from jax import lax
from jax.experimental import pallas as pl
from jax.experimental.pallas import tpu as pltpu


# ------------------------------- helpers ------------------------------------

def _round_up(x, m):
    return ((x + m - 1) // m) * m


def _cdiv(a, b):
    return (a + b - 1) // b


def _sublane_align(dtype):
    # f32 -> 8 sublanes, bf16 -> 16 (packed pairs), 8-bit -> 32.
    return 8 * max(1, 4 // jnp.dtype(dtype).itemsize)


def _choose_tile(dim, align, target):
    """Pick (tile, padded_dim): tile % align == 0 and padded_dim % tile == 0,
    balancing tiles so ragged dims waste little padding (keeps the pad/slice
    HBM round trip small)."""
    target = max(align, _round_up(target, align))
    padded_one = _round_up(dim, align)
    if padded_one <= target:
        return padded_one, padded_one
    n = _cdiv(dim, target)
    tile = _round_up(_cdiv(dim, n), align)
    return tile, tile * n


def _chunk_div(total, align, target):
    """Largest chunk = align*k dividing `total` with chunk <= max(target, align)."""
    m = total // align
    target = max(target, align)
    best = 1
    for k in range(1, m + 1):
        if m % k == 0 and align * k <= target:
            best = k
    return align * best


def _pad_cast(x, shape, dtype):
    pads = [(0, t - s) for s, t in zip(x.shape, shape)]
    if any(p != (0, 0) for p in pads):
        x = jnp.pad(x, pads)
    return x.astype(dtype)


def _vmem_limit_bytes():
    # Per-generation scoped-VMEM budget (review): ~96 MiB on 128-MiB parts
    # (v5e/v6e), ~48 MiB on v7x (64 MiB per TensorCore).  Safe fallback if the
    # hardware query is unavailable.
    try:
        cap = int(pltpu.get_tpu_info().vmem_capacity_bytes)
    except Exception:
        cap = 64 * 1024 * 1024
    return int(min((cap * 3) // 4, 100 * 1024 * 1024))


# ------------------------------- kernels ------------------------------------

def _general_kernel(q_ref, w_ref, ctx_ref, out_ref, qw_ref, *, hoist_qw):
    # q_ref  : (1, Lq_t, Dq_p)   w_ref: (Dq_p, Dc_p)   ctx_ref: (1, Lc_t, Dc_p)
    # out_ref: (1, Lq_t, Lc_t)   qw_ref: VMEM (Lq_t, Dc_p) compute-dtype scratch
    # Grid = (B, n_lq, n_lc); Lc innermost.  All inputs arrive in compute_dtype.

    def project_q():
        return jnp.dot(q_ref[0], w_ref[...],
                       preferred_element_type=jnp.float32).astype(qw_ref.dtype)

    if hoist_qw:
        # Hoist q @ W once per (batch, Lq-tile); Lc axis is "arbitrary".
        @pl.when(pl.program_id(2) == 0)
        def _():
            qw_ref[...] = project_q()
        qw = qw_ref[...]
    else:
        # Recompute per step so the Lc axis can be "parallel" (megacore).
        qw = project_q()

    # scores = (q @ W) @ ctx^T  as an NT-form contraction (no explicit transpose).
    scores = lax.dot_general(
        qw, ctx_ref[0],
        dimension_numbers=(((1,), (1,)), ((), ())),
        preferred_element_type=jnp.float32)
    out_ref[0] = scores.astype(out_ref.dtype)


def _mlp_kernel(q_ref, wq_ref, b_ref, cp_ref, v_ref, out_ref, uqT_ref, *,
                hoist_uq, lc_sub, dq_chunk):
    # q_ref : (1, Lq_t, Dq_p)    wq_ref: (Dq_p, Dq_p)   b_ref: (Dq_p, 1) f32
    # cp_ref: (1, Lc_t, Dq_p)    v_ref : (Dq_p, 1)      out_ref: (1, Lc_t, Lq_t)
    # uqT_ref: VMEM (Dq_p, Lq_t) compute-dtype scratch (query projection stored
    #          TRANSPOSED so Lq stays the lane axis end-to-end; the v-reduction
    #          then runs over sublanes and lands lane-dense).
    lc_t = cp_ref.shape[1]
    lq_t = q_ref.shape[1]
    dq_p = q_ref.shape[2]
    n_sub = lc_t // lc_sub
    n_dq = dq_p // dq_chunk

    def project_queries():
        # uqT[d, q] = sum_k Wq[d, k] * q[q, k]  (NT form) ; bias added as a column.
        uqT = lax.dot_general(
            wq_ref[...], q_ref[0],
            dimension_numbers=(((1,), (1,)), ((), ())),
            preferred_element_type=jnp.float32)
        uqT_ref[...] = (uqT + b_ref[...]).astype(uqT_ref.dtype)

    if hoist_uq:
        @pl.when(pl.program_id(2) == 0)
        def _():
            project_queries()
    else:
        project_queries()

    def one_chunk(row0, col0):
        wc_c = cp_ref[0, pl.ds(row0, lc_sub), pl.ds(col0, dq_chunk)]   # (lc_sub, cd)
        uq_c = uqT_ref[pl.ds(col0, dq_chunk), :]                       # (cd, Lq_t)
        v_c = v_ref[pl.ds(col0, dq_chunk), :]                          # (cd, 1)
        t = jnp.tanh(wc_c[:, :, None] + uq_c[None, :, :])              # (lc_sub, cd, Lq_t)
        return jnp.sum((t * v_c[None, :, :]).astype(jnp.float32), axis=1)

    def lc_rows(row0):
        if n_dq == 1:
            part = one_chunk(row0, 0)
        else:
            part = lax.fori_loop(
                0, n_dq,
                lambda d, p: p + one_chunk(
                    row0, pl.multiple_of(d * dq_chunk, dq_chunk)),
                jnp.zeros((lc_sub, lq_t), jnp.float32))
        out_ref[0, pl.ds(row0, lc_sub), :] = part.astype(out_ref.dtype)

    if n_sub == 1:
        lc_rows(0)
    else:
        def body(s, carry):
            lc_rows(pl.multiple_of(s * lc_sub, lc_sub))
            return carry
        lax.fori_loop(0, n_sub, body, 0)


# ------------------------------- wrappers -----------------------------------

def attention_scorer_general(context, queries, w_in, *,
                             compute_dtype=jnp.float32, out_dtype=jnp.float32,
                             lq_tile=512, lc_tile=1024):
    """'general' attention: bmm(queries, (context @ W^T)^T) -> (B, Lq, Lc)."""
    B, Lc, Dc = context.shape
    Bq, Lq, Dq = queries.shape
    assert Bq == B
    assert w_in.shape == (Dq, Dc)

    sub = _sublane_align(compute_dtype)
    Lq_t, Lq_p = _choose_tile(Lq, sub, lq_tile)      # sublane dim of q / output
    Lc_t, Lc_p = _choose_tile(Lc, 128, lc_tile)      # lane dim of the output
    Dq_p = _round_up(Dq, 128)
    Dc_p = _round_up(Dc, 128)

    # Pad + cast ONCE in the wrapper (bf16 on the wire when requested): halves
    # input HBM traffic and double-buffered VMEM on this mem-bound path.
    q_p = _pad_cast(queries, (B, Lq_p, Dq_p), compute_dtype)
    c_p = _pad_cast(context, (B, Lc_p, Dc_p), compute_dtype)
    w_p = _pad_cast(w_in, (Dq_p, Dc_p), compute_dtype)

    n_lq = Lq_p // Lq_t
    n_lc = Lc_p // Lc_t
    # Hoist q@W across the Lc sweep when there are >=2 (b, lq) parallel units;
    # otherwise recompute per step and keep every grid axis "parallel" so a
    # second TensorCore (v7x megacore) can split the Lc axis.
    hoist_qw = (B * n_lq) >= 2
    lc_sem = "arbitrary" if hoist_qw else "parallel"

    itm = jnp.dtype(compute_dtype).itemsize
    proj_reps = 1 if hoist_qw else n_lc
    flops = (2 * B * n_lq * proj_reps * Lq_t * Dq_p * Dc_p
             + 2 * B * Lq_p * Dc_p * Lc_p)
    bytes_accessed = (itm * (q_p.size + n_lq * c_p.size + w_p.size)
                      + jnp.dtype(out_dtype).itemsize * B * Lq_p * Lc_p)

    out = pl.pallas_call(
        functools.partial(_general_kernel, hoist_qw=hoist_qw),
        out_shape=jax.ShapeDtypeStruct((B, Lq_p, Lc_p), out_dtype),
        grid=(B, n_lq, n_lc),
        in_specs=[
            pl.BlockSpec((1, Lq_t, Dq_p), lambda b, i, j: (b, i, 0)),
            pl.BlockSpec((Dq_p, Dc_p), lambda b, i, j: (0, 0)),
            pl.BlockSpec((1, Lc_t, Dc_p), lambda b, i, j: (b, j, 0)),
        ],
        out_specs=pl.BlockSpec((1, Lq_t, Lc_t), lambda b, i, j: (b, i, j)),
        scratch_shapes=[pltpu.VMEM((Lq_t, Dc_p), compute_dtype)],
        compiler_params=pltpu.CompilerParams(
            dimension_semantics=("parallel", "parallel", lc_sem),
            vmem_limit_bytes=_vmem_limit_bytes()),
        cost_estimate=pl.CostEstimate(flops=int(flops), transcendentals=0,
                                      bytes_accessed=int(bytes_accessed)),
    )(q_p, w_p, c_p)

    if (Lq_p, Lc_p) != (Lq, Lc):
        out = out[:, :Lq, :Lc]
    return out


def attention_scorer_mlp(context, queries, w_ctx, w_qry, b_qry, v, *,
                         compute_dtype=jnp.float32, out_dtype=jnp.float32,
                         lq_tile=128, lc_tile=512, lc_sub=8, dq_chunk=128):
    """'mlp' attention: v . tanh(Wc@ctx + Wq@qry + bq), PyTorch .view() semantics."""
    B, Lc, Dc = context.shape
    Bq, Lq, Dq = queries.shape
    assert Bq == B
    assert w_ctx.shape == (Dq, Dc)
    assert w_qry.shape == (Dq, Dq)

    # Context projection precomputed ONCE in the wrapper (per review): avoids the
    # (n_lq-1)x in-kernel recompute and drops Dc from the kernel's DMA stream.
    ctx_proj = jnp.einsum("bcd,ed->bce", context, w_ctx)           # (B, Lc, Dq) f32

    sub = _sublane_align(compute_dtype)
    Lq_t, Lq_p = _choose_tile(Lq, 128, lq_tile)      # lane dim of the output
    Lc_t, Lc_p = _choose_tile(Lc, sub, lc_tile)      # sublane dim of the output
    Dq_p = _round_up(Dq, 128)

    lc_sub = _chunk_div(Lc_t, sub, lc_sub)           # bounds the live tanh block
    dq_chunk = _chunk_div(Dq_p, 128, dq_chunk)

    q_p = _pad_cast(queries, (B, Lq_p, Dq_p), compute_dtype)
    cp_p = _pad_cast(ctx_proj, (B, Lc_p, Dq_p), compute_dtype)
    wq_p = _pad_cast(w_qry, (Dq_p, Dq_p), compute_dtype)
    b_col = _pad_cast(jnp.reshape(b_qry, (Dq, 1)), (Dq_p, 1), jnp.float32)
    v_col = _pad_cast(jnp.reshape(v, (Dq, 1)), (Dq_p, 1), compute_dtype)

    n_lq = Lq_p // Lq_t
    n_lc = Lc_p // Lc_t
    hoist_uq = (B * n_lq) >= 2
    lc_sem = "arbitrary" if hoist_uq else "parallel"

    itm = jnp.dtype(compute_dtype).itemsize
    proj_reps = 1 if hoist_uq else n_lc
    flops = (2 * B * n_lq * proj_reps * Lq_t * Dq_p * Dq_p
             + 4 * B * Lc_p * Lq_p * Dq_p)
    transcendentals = B * Lc_p * Lq_p * Dq_p
    bytes_accessed = (itm * (q_p.size + n_lq * cp_p.size + wq_p.size + v_col.size)
                      + 4 * b_col.size
                      + jnp.dtype(out_dtype).itemsize * B * Lc_p * Lq_p)

    scores_clq = pl.pallas_call(
        functools.partial(_mlp_kernel, hoist_uq=hoist_uq,
                          lc_sub=lc_sub, dq_chunk=dq_chunk),
        out_shape=jax.ShapeDtypeStruct((B, Lc_p, Lq_p), out_dtype),
        grid=(B, n_lq, n_lc),
        in_specs=[
            pl.BlockSpec((1, Lq_t, Dq_p), lambda b, i, j: (b, i, 0)),
            pl.BlockSpec((Dq_p, Dq_p), lambda b, i, j: (0, 0)),
            pl.BlockSpec((Dq_p, 1), lambda b, i, j: (0, 0)),
            pl.BlockSpec((1, Lc_t, Dq_p), lambda b, i, j: (b, j, 0)),
            pl.BlockSpec((Dq_p, 1), lambda b, i, j: (0, 0)),
        ],
        out_specs=pl.BlockSpec((1, Lc_t, Lq_t), lambda b, i, j: (b, j, i)),
        scratch_shapes=[pltpu.VMEM((Dq_p, Lq_t), compute_dtype)],
        compiler_params=pltpu.CompilerParams(
            dimension_semantics=("parallel", "parallel", lc_sem),
            vmem_limit_bytes=_vmem_limit_bytes()),
        cost_estimate=pl.CostEstimate(flops=int(flops),
                                      transcendentals=int(transcendentals),
                                      bytes_accessed=int(bytes_accessed)),
    )(q_p, wq_p, b_col, cp_p, v_col)

    # Un-pad FIRST, then reproduce PyTorch's .view(B, Lq, Lc) on (B, Lc, Lq)-ordered
    # data: a raw memory reshape, intentionally NOT a transpose.
    if (Lc_p, Lq_p) != (Lc, Lq):
        scores_clq = scores_clq[:, :Lc, :Lq]
    return jnp.reshape(scores_clq, (B, Lq, Lc))


# ----------------------------- reference (plain JAX) -------------------------

def _ref_general(context, queries, w_in):
    ctx_t = jnp.einsum("bcd,qd->bcq", context, w_in)              # (B, Lc, Dq)
    return jnp.einsum("bld,bcd->blc", queries, ctx_t)             # (B, Lq, Lc)


def _ref_mlp(context, queries, w_ctx, w_qry, b_qry, v):
    B, Lc, Dc = context.shape
    _, Lq, Dq = queries.shape
    wq = jnp.einsum("bcd,ed->bce", context, w_ctx)                # (B, Lc, Dq)
    uh = jnp.einsum("bqd,ed->bqe", queries, w_qry) + b_qry        # (B, Lq, Dq)
    wquh = jnp.tanh(wq[:, :, None, :] + uh[:, None, :, :])        # (B, Lc, Lq, Dq)
    s = jnp.einsum("bcqd,d->bcq", wquh, v.reshape(Dq))            # (B, Lc, Lq)
    return jnp.reshape(s, (B, Lq, Lc))                            # raw view, like PyTorch


# ------------------------------- main ----------------------------------------

if __name__ == "__main__":
    key = jax.random.PRNGKey(0)
    B, Lc, Lq = 2, 16, 8
    Dq, Dc = 32, 16        # dim = (dim_query, dim_context)

    k = jax.random.split(key, 8)
    context = jax.random.normal(k[0], (B, Lc, Dc), dtype=jnp.float32)
    queries = jax.random.normal(k[1], (B, Lq, Dq), dtype=jnp.float32)

    # deterministic synthetic parameters (shapes match the nn.Linear weights)
    w_in = 0.1 * jax.random.normal(k[2], (Dq, Dc), dtype=jnp.float32)   # linear_in
    w_ctx = 0.1 * jax.random.normal(k[3], (Dq, Dc), dtype=jnp.float32)  # linear_context
    w_qry = 0.1 * jax.random.normal(k[4], (Dq, Dq), dtype=jnp.float32)  # linear_query.weight
    b_qry = 0.1 * jax.random.normal(k[5], (Dq,), dtype=jnp.float32)     # linear_query.bias
    v = 0.1 * jax.random.normal(k[6], (1, Dq), dtype=jnp.float32)       # v.weight

    ref_gen = _ref_general(context, queries, w_in)
    ref_mlp = _ref_mlp(context, queries, w_ctx, w_qry, b_qry, v)

    # ---- f32 compute (default) ----
    out_gen = attention_scorer_general(context, queries, w_in)
    jax.block_until_ready(out_gen)
    np.testing.assert_allclose(np.asarray(out_gen), np.asarray(ref_gen),
                               rtol=1e-5, atol=1e-5)

    out_mlp = attention_scorer_mlp(context, queries, w_ctx, w_qry, b_qry, v)
    jax.block_until_ready(out_mlp)
    np.testing.assert_allclose(np.asarray(out_mlp), np.asarray(ref_mlp),
                               rtol=1e-5, atol=1e-5)

    # ---- bf16 inputs/operands on the wire (v5e/v6e/v7x fast path), f32 accumulation ----
    out_gen_bf = attention_scorer_general(context, queries, w_in,
                                          compute_dtype=jnp.bfloat16)
    jax.block_until_ready(out_gen_bf)
    np.testing.assert_allclose(np.asarray(out_gen_bf), np.asarray(ref_gen),
                               rtol=5e-2, atol=1e-1)

    out_mlp_bf = attention_scorer_mlp(context, queries, w_ctx, w_qry, b_qry, v,
                                      compute_dtype=jnp.bfloat16)
    jax.block_until_ready(out_mlp_bf)
    np.testing.assert_allclose(np.asarray(out_mlp_bf), np.asarray(ref_mlp),
                               rtol=5e-2, atol=1e-1)

    assert out_gen.shape == (B, Lq, Lc)
    assert out_mlp.shape == (B, Lq, Lc)

    # ---- multi-tile / loop coverage (f32): ragged Lq/Lc, several Lc tiles ----
    B2, Lc2, Lq2, Dq2, Dc2 = 1, 300, 24, 40, 24
    k2 = jax.random.split(jax.random.PRNGKey(1), 3)
    context2 = jax.random.normal(k2[0], (B2, Lc2, Dc2), dtype=jnp.float32)
    queries2 = jax.random.normal(k2[1], (B2, Lq2, Dq2), dtype=jnp.float32)
    w_in2 = 0.1 * jax.random.normal(k2[2], (Dq2, Dc2), dtype=jnp.float32)

    out_gen2 = attention_scorer_general(context2, queries2, w_in2,
                                        lq_tile=8, lc_tile=128)   # hoisted, multi-tile
    jax.block_until_ready(out_gen2)
    np.testing.assert_allclose(np.asarray(out_gen2),
                               np.asarray(_ref_general(context2, queries2, w_in2)),
                               rtol=1e-4, atol=1e-4)

    out_gen3 = attention_scorer_general(context2, queries2[:, :8, :], w_in2,
                                        lc_tile=128)              # non-hoist, Lc parallel
    jax.block_until_ready(out_gen3)
    np.testing.assert_allclose(np.asarray(out_gen3),
                               np.asarray(_ref_general(context2, queries2[:, :8, :], w_in2)),
                               rtol=1e-4, atol=1e-4)

    # ---- mlp with ragged Lc/Lq, Dq chunking (n_dq=2), lc sub-tiling (n_sub=2) ----
    B3, Lc3, Lq3, Dq3, Dc3 = 1, 40, 20, 136, 24
    k3 = jax.random.split(jax.random.PRNGKey(2), 6)
    context3 = jax.random.normal(k3[0], (B3, Lc3, Dc3), dtype=jnp.float32)
    queries3 = jax.random.normal(k3[1], (B3, Lq3, Dq3), dtype=jnp.float32)
    w_ctx3 = 0.1 * jax.random.normal(k3[2], (Dq3, Dc3), dtype=jnp.float32)
    w_qry3 = 0.1 * jax.random.normal(k3[3], (Dq3, Dq3), dtype=jnp.float32)
    b_qry3 = 0.1 * jax.random.normal(k3[4], (Dq3,), dtype=jnp.float32)
    v3 = 0.1 * jax.random.normal(k3[5], (1, Dq3), dtype=jnp.float32)

    out_mlp2 = attention_scorer_mlp(context3, queries3, w_ctx3, w_qry3, b_qry3, v3,
                                    lc_tile=16, lc_sub=8, dq_chunk=128)
    jax.block_until_ready(out_mlp2)
    np.testing.assert_allclose(
        np.asarray(out_mlp2),
        np.asarray(_ref_mlp(context3, queries3, w_ctx3, w_qry3, b_qry3, v3)),
        rtol=1e-4, atol=1e-4)

    print("KERNEL_OK")
</pallas_src>

<mosaic_0001>
module attributes {stable_mosaic.version = 11 : i64} {
  func.func @_general_kernel(%arg0: i32, %arg1: i32, %arg2: i32, %arg3: memref<1x8x128xf32, #tpu.memory_space<vmem>>, %arg4: memref<128x128xf32, #tpu.memory_space<vmem>>, %arg5: memref<1x128x128xf32, #tpu.memory_space<vmem>>, %arg6: memref<1x8x128xf32, #tpu.memory_space<vmem>>, %arg7: memref<8x128xf32, #tpu.memory_space<vmem>>) attributes {dimension_semantics = [#tpu.dimension_semantics<parallel>, #tpu.dimension_semantics<parallel>, #tpu.dimension_semantics<arbitrary>], iteration_bounds = array<i64: 2, 1, 1>, scalar_prefetch = 0 : i64, scratch_operands = 1 : i64, tpu.core_type = #tpu.core_type<tc>, window_params = [{transform_indices = @transform_0, window_bounds = array<i64: 1, 8, 128>}, {pipeline_mode = #tpu.pipeline_mode<synchronous>, transform_indices = @transform_1, window_bounds = array<i64: 128, 128>}, {transform_indices = @transform_2, window_bounds = array<i64: 1, 128, 128>}, {transform_indices = @transform_3, window_bounds = array<i64: 1, 8, 128>}]} {
    %c0_i32 = arith.constant 0 : i32
    %0 = arith.cmpi eq, %arg2, %c0_i32 : i32
    %1 = arith.extui %0 : i1 to i32
    %c0_i32_0 = arith.constant 0 : i32
    %2 = arith.cmpi ne, %1, %c0_i32_0 : i32
    scf.if %2 {
      %c0_8 = arith.constant 0 : index
      %c0_9 = arith.constant 0 : index
      %c0_10 = arith.constant 0 : index
      %10 = vector.load %arg3[%c0_8, %c0_9, %c0_10] : memref<1x8x128xf32, #tpu.memory_space<vmem>>, vector<1x8x128xf32>
      %11 = vector.shape_cast %10 : vector<1x8x128xf32> to vector<8x128xf32>
      %c0_11 = arith.constant 0 : index
      %c0_12 = arith.constant 0 : index
      %12 = vector.load %arg4[%c0_11, %c0_12] : memref<128x128xf32, #tpu.memory_space<vmem>>, vector<128x128xf32>
      %cst_13 = arith.constant dense<0.000000e+00> : vector<8x128xf32>
      %13 = tpu.matmul %11, %12, %cst_13 {dimension_numbers = #tpu.dot_dimension_numbers<[1], [0], [0], [1], [0, 0, 1, 1], [], []>} : vector<8x128xf32>, vector<128x128xf32>, vector<8x128xf32> -> vector<8x128xf32>
      %c0_14 = arith.constant 0 : index
      %c0_15 = arith.constant 0 : index
      %14 = vector.load %arg7[%c0_14, %c0_15] : memref<8x128xf32, #tpu.memory_space<vmem>>, vector<8x128xf32>
      tpu.vector_store %arg7[%c0_14, %c0_15], %13 {strides = array<i32>} : memref<8x128xf32, #tpu.memory_space<vmem>>, vector<8x128xf32>,
    } else {
    }
    %c0 = arith.constant 0 : index
    %c0_1 = arith.constant 0 : index
    %3 = vector.load %arg7[%c0, %c0_1] : memref<8x128xf32, #tpu.memory_space<vmem>>, vector<8x128xf32>
    %c0_2 = arith.constant 0 : index
    %c0_3 = arith.constant 0 : index
    %c0_4 = arith.constant 0 : index
    %4 = vector.load %arg5[%c0_2, %c0_3, %c0_4] : memref<1x128x128xf32, #tpu.memory_space<vmem>>, vector<1x128x128xf32>
    %5 = vector.shape_cast %4 : vector<1x128x128xf32> to vector<128x128xf32>
    %cst = arith.constant dense<0.000000e+00> : vector<8x128xf32>
    %6 = tpu.matmul %3, %5, %cst {dimension_numbers = #tpu.dot_dimension_numbers<[1], [1], [0], [0], [0, 0, 1, 0], [], []>} : vector<8x128xf32>, vector<128x128xf32>, vector<8x128xf32> -> vector<8x128xf32>
    %c0_5 = arith.constant 0 : index
    %c0_6 = arith.constant 0 : index
    %c0_7 = arith.constant 0 : index
    %7 = vector.load %arg6[%c0_5, %c0_6, %c0_7] : memref<1x8x128xf32, #tpu.memory_space<vmem>>, vector<1x8x128xf32>
    %8 = vector.shape_cast %7 : vector<1x8x128xf32> to vector<8x128xf32>
    %9 = vector.shape_cast %6 : vector<8x128xf32> to vector<1x8x128xf32>
    tpu.vector_store %arg6[%c0_5, %c0_6, %c0_7], %9 {strides = array<i32>} : memref<1x8x128xf32, #tpu.memory_space<vmem>>, vector<1x8x128xf32>,
    return
  }
  func.func @transform_0(%arg0: i32, %arg1: i32, %arg2: i32) -> (i32, i32, i32) {
    %c0_i32 = arith.constant 0 : i32
    %c0_i32_0 = arith.constant 0 : i32
    return %arg0, %arg1, %c0_i32 : i32, i32, i32
  }
  func.func @transform_1(%arg0: i32, %arg1: i32, %arg2: i32) -> (i32, i32) {
    %c0_i32 = arith.constant 0 : i32
    %c0_i32_0 = arith.constant 0 : i32
    %c0_i32_1 = arith.constant 0 : i32
    return %c0_i32, %c0_i32_0 : i32, i32
  }
  func.func @transform_2(%arg0: i32, %arg1: i32, %arg2: i32) -> (i32, i32, i32) {
    %c0_i32 = arith.constant 0 : i32
    %c0_i32_0 = arith.constant 0 : i32
    return %arg0, %arg2, %c0_i32 : i32, i32, i32
  }
  func.func @transform_3(%arg0: i32, %arg1: i32, %arg2: i32) -> (i32, i32, i32) {
    %c0_i32 = arith.constant 0 : i32
    return %arg0, %arg1, %arg2 : i32, i32, i32
  }
}

</mosaic_0001>

<llo_original>
// kernel: tpu_custom_call.1
$region0: #{tpu_custom_call.1}
  #allocation0 [shape = 'u32[]', space=smem, size = 0x4, offset = 0x4, fixed_abs, tag = 'smem constant byte address 0x4 - core index']
  #allocation1 [shape = 'u32[72,128]{1,0:T(1,128)}', space=vmem, size = 0x9000, scoped, tag = 'internal scratch']
  #allocation2 [shape = 'f32[8,128]{1,0:T(8,128)}', space=vmem, size = 0x1000, scoped, tag = 'scratch operand']
  %s0 = inlined_call_operand.hbm [shape: f32[2,8,128], index: 0, kind: input, shape index: {}]
  %s1 = inlined_call_operand.hbm [shape: f32[128,128], index: 1, kind: input, shape index: {}]
  %s2 = inlined_call_operand.hbm [shape: f32[2,128,128], index: 2, kind: input, shape index: {}]
  %s3 = inlined_call_operand.hbm [shape: f32[2,8,128], index: 3, kind: output, shape index: {}]
  %s4 = sld [smem:[#allocation0]]
  $region61: #{tpu_custom_call.1} parent=0
    _
  %s6 = ssub.s32 1, %s4
  %s7 = scalar_select 0, %s6, %s4
  $region1: #{tpu_custom_call.1} parent=0
    #allocation3 [shape = 'u8[8192]{0}', space=vmem, size = 0x2000, scoped, tag = 'input window, operand 0']
    #allocation4 [shape = 's32[2]{0}', space=sflag, size = 0x8, scoped, tag = 'scoped memory for tpu_custom_call.1']
    #allocation5 [shape = 's32[2]{0}', space=sflag, size = 0x8, scoped, tag = 'scoped memory for tpu_custom_call.1']
    #allocation6 [shape = 'u8[65536]{0}', space=vmem, size = 0x10000, scoped, tag = 'input window, operand 1, single buffered']
    #allocation7 [shape = 's32[1]{0}', space=sflag, size = 0x4, scoped, tag = 'scoped memory for tpu_custom_call.1']
    #allocation8 [shape = 'u8[131072]{0}', space=vmem, size = 0x20000, scoped, tag = 'input window, operand 2']
    #allocation9 [shape = 'u8[8192]{0}', space=vmem, size = 0x2000, scoped, tag = 'output window, operand 0']
    %8 = vsyncpa [#allocation4], 0
    %s9 = scalar_lea.sflag [#allocation4], 1
    %10 = vsyncpa %s9, 0
    %11 = vsyncpa [#allocation7], 0
    %12 = vsyncpa [#allocation5], 0
    %s13 = scalar_lea.sflag [#allocation5], 1
    %14 = vsyncpa %s13, 0
    loop: start=0, step=1, limit=4
    $region2: #{tpu_custom_call.1} parent=1 // loop_pre_header
      _
    $region3: #{tpu_custom_call.1} parent=1 // loop_header
      %s16 = sphi 0, %s20
      %p17 = scmp.ge.s32.totalorder %s16, 4
      %s23 = sphi 0, %s42
      %s24 = sphi 0, %s38
      %s25 = sphi 0, %s34
      %s26 = sphi 0, %s23
      %s27 = sphi 0, %s24
      %s28 = sphi 0, %s25
      %s29 = sphi 0, %s26
      %s30 = sphi 0, %s27
      %s31 = sphi 0, %s28
      %s47 = sphi 0, %s49
      %s50 = sphi 0, %s47
      %s51 = sphi 0, %s50
      %s67 = sphi 0, %s51
      %s71 = sphi 0, %s71
      %s73 = sphi 0, %s71
      %s74 = sphi 0, %s73
      %s88 = sphi 0, %s74
      %s96 = sphi 0, %s98
      %s99 = sphi 0, %s96
      %s100 = sphi 0, %s99
      %s116 = sphi 0, %s100
      %s126 = sphi 0, %s128
      %s129 = sphi 0, %s126
      %s130 = sphi 0, %s129
      %s146 = sphi 0, %s130
    $region4: #{tpu_custom_call.1} parent=1 // loop_header_branch
      %19 = sbr.rel (%p17) target = $region8
    $region5: #{tpu_custom_call.1} parent=1 // loop_body
      %s21 = ssub.s32 %s16, 1
      %s22 = ssub.s32 %s16, 2
      %s32 = sadd.s32 1, %s25
      %p33 = scmp.ge.s32.totalorder %s32, 1
      %s34 = scalar_select %p33, 0, %s32
      %s35 = sadd.s32 1, %s24
      %s36 = scalar_select %p33, %s35, %s24
      %p37 = scmp.ge.s32.totalorder %s36, 1
      %s38 = scalar_select %p37, 0, %s36
      %s39 = sadd.s32 1, %s23
      %s40 = scalar_select %p37, %s39, %s23
      %p41 = scmp.ge.s32.totalorder %s40, 2
      %s42 = scalar_select %p41, 0, %s40
      %s43 = ssub.s32 %s23, %s42
      %s44 = ssub.s32 %s24, %s38
      %s45 = sor.u32 %s43, %s44
      %p46 = scmp.eq.s32.totalorder %s45, 0
      %s48 = sadd.s32 %s47, 1
      %s49 = scalar_select %p46, %s47, %s48
      %p52 = pneg %p46
      %p53 = scmp.eq.s32.totalorder %s16, 1
      %p54 = por %p52, %p53
      %p55 = scmp.ne.s32.totalorder %s47, %s50
      %p56 = scmp.eq.s32.totalorder %s16, 0
      %p57 = por %p55, %p56
      %p58 = scmp.ne.s32.totalorder %s47, %s50
      %p59 = scmp.eq.s32.totalorder %s21, 1
      %p60 = por %p58, %p59
      %p61 = scmp.ne.s32.totalorder %s50, %s51
      %p62 = scmp.eq.s32.totalorder %s21, 0
      %p63 = por %p61, %p62
      %p64 = scmp.ne.s32.totalorder %s50, %s51
      %p65 = scmp.eq.s32.totalorder %s22, 1
      %p66 = por %p64, %p65
      %p68 = scmp.ne.s32.totalorder %s51, %s67
      %p69 = scmp.eq.s32.totalorder %s22, 0
      %p70 = por %p68, %p69
      %s72 = sadd.s32 %s71, 1
      %p75 = scmp.eq.s32.totalorder %s16, 1
      %p76 = scmp.ne.s32.totalorder %s71, %s73
      %p77 = scmp.eq.s32.totalorder %s16, 0
      %p78 = por %p76, %p77
      %p79 = scmp.ne.s32.totalorder %s71, %s73
      %p80 = scmp.eq.s32.totalorder %s21, 1
      %p81 = por %p79, %p80
      %p82 = scmp.ne.s32.totalorder %s73, %s74
      %p83 = scmp.eq.s32.totalorder %s21, 0
      %p84 = por %p82, %p83
      %p85 = scmp.ne.s32.totalorder %s73, %s74
      %p86 = scmp.eq.s32.totalorder %s22, 1
      %p87 = por %p85, %p86
      %p89 = scmp.ne.s32.totalorder %s74, %s88
      %p90 = scmp.eq.s32.totalorder %s22, 0
      %p91 = por %p89, %p90
      %s92 = ssub.s32 %s23, %s42
      %s93 = ssub.s32 %s25, %s34
      %s94 = sor.u32 %s92, %s93
      %p95 = scmp.eq.s32.totalorder %s94, 0
      %s97 = sadd.s32 %s96, 1
      %s98 = scalar_select %p95, %s96, %s97
      %p101 = pneg %p95
      %p102 = scmp.eq.s32.totalorder %s16, 1
      %p103 = por %p101, %p102
      %p104 = scmp.ne.s32.totalorder %s96, %s99
      %p105 = scmp.eq.s32.totalorder %s16, 0
      %p106 = por %p104, %p105
      %p107 = scmp.ne.s32.totalorder %s96, %s99
      %p108 = scmp.eq.s32.totalorder %s21, 1
      %p109 = por %p107, %p108
      %p110 = scmp.ne.s32.totalorder %s99, %s100
      %p111 = scmp.eq.s32.totalorder %s21, 0
      %p112 = por %p110, %p111
      %p113 = scmp.ne.s32.totalorder %s99, %s100
      %p114 = scmp.eq.s32.totalorder %s22, 1
      %p115 = por %p113, %p114
      %p117 = scmp.ne.s32.totalorder %s100, %s116
      %p118 = scmp.eq.s32.totalorder %s22, 0
      %p119 = por %p117, %p118
      %s120 = ssub.s32 %s23, %s42
      %s121 = ssub.s32 %s24, %s38
      %s122 = sor.u32 %s120, %s121
      %s123 = ssub.s32 %s25, %s34
      %s124 = sor.u32 %s122, %s123
      %p125 = scmp.eq.s32.totalorder %s124, 0
      %s127 = sadd.s32 %s126, 1
      %s128 = scalar_select %p125, %s126, %s127
      %p131 = pneg %p125
      %p132 = scmp.eq.s32.totalorder %s16, 1
      %p133 = por %p131, %p132
      %p134 = scmp.ne.s32.totalorder %s126, %s129
      %p135 = scmp.eq.s32.totalorder %s16, 0
      %p136 = por %p134, %p135
      %p137 = scmp.ne.s32.totalorder %s126, %s129
      %p138 = scmp.eq.s32.totalorder %s21, 1
      %p139 = por %p137, %p138
      %p140 = scmp.ne.s32.totalorder %s129, %s130
      %p141 = scmp.eq.s32.totalorder %s21, 0
      %p142 = por %p140, %p141
      %p143 = scmp.ne.s32.totalorder %s129, %s130
      %p144 = scmp.eq.s32.totalorder %s22, 1
      %p145 = por %p143, %p144
      %p147 = scmp.ne.s32.totalorder %s130, %s146
      %p148 = scmp.eq.s32.totalorder %s22, 0
      %p149 = por %p147, %p148
      %p150 = scmp.le.s32.totalorder 1, %s16
      %p151 = scmp.lt.s32.totalorder %s16, 3
      %p152 = pnand %p150, %p151
      %p153 = pneg %p152
      // Predicated region
      $region9: #{tpu_custom_call.1} parent=5 // pred_check
        _
      $region10: #{tpu_custom_call.1} parent=5 // pred_check_branch
        %155 = sbr.rel (%p152) target = $region12
      $region11: #{tpu_custom_call.1} parent=5 // pred_region
        %s156 = ssub.s32 %s16, 1
        // Predicated region
        $region13: #{tpu_custom_call.1} parent=11 // pred_check
          %p157 = pneg %p84
        $region14: #{tpu_custom_call.1} parent=11 // pred_check_branch
          %159 = sbr.rel (%p157) target = $region16
        $region15: #{tpu_custom_call.1} parent=11 // pred_region
          %161 = vsyncadd [#allocation7], 0
          %s162 = sshll.u32 %s1, 4
          %s163 = int_to_ptr.hbm [resolvable:$true] %s162
          %s164 = sshll.u32 [#allocation6], 4
          %s165 = int_to_ptr.vmem [resolvable:$true] %s164
          %170 = dma.hbm_to_vmem [thread:$0]  %s163, 2048, %s165, [#allocation7], 128, 128, 8
        $region16: #{tpu_custom_call.1} parent=11 // pred_fallthru
          _
      $region12: #{tpu_custom_call.1} parent=5 // pred_fallthru
        _
      %p171 = scmp.lt.s32.totalorder %s16, 2
      // Predicated region
      $region17: #{tpu_custom_call.1} parent=5 // pred_check
        %p172 = pneg %p171
      $region18: #{tpu_custom_call.1} parent=5 // pred_check_branch
        %174 = sbr.rel (%p172) target = $region20
      $region19: #{tpu_custom_call.1} parent=5 // pred_region
        // Predicated region
        $region21: #{tpu_custom_call.1} parent=19 // pred_check
          %p175 = pneg %p57
        $region22: #{tpu_custom_call.1} parent=19 // pred_check_branch
          %177 = sbr.rel (%p175) target = $region24
        $region23: #{tpu_custom_call.1} parent=19 // pred_region
          %s178 = sand.u32 %s16, 1
          %s179 = scalar_lea.sflag [#allocation4], %s178
          %s180 = sand.u32 %s47, 1
          %s181 = smul.addr %s180, 8
          %s182 = scalar_lea.vmem [#allocation3], %s181
          %184 = vsyncadd %s179, 0
          %s185 = sadd.s32 %s24, %s23
          %s186 = smul.addr %s185, 8
          %s187 = scalar_lea.hbm %s0, %s186
          %s189 = sshll.u32 %s187, 4
          %s190 = int_to_ptr.hbm [resolvable:$true] %s189
          %s191 = sshll.u32 %s182, 4
          %s192 = int_to_ptr.vmem [resolvable:$true] %s191
          %194 = dma.hbm_to_vmem [thread:$0]  %s190, 128, %s192, %s179
        $region24: #{tpu_custom_call.1} parent=19 // pred_fallthru
          _
        // Predicated region
        $region25: #{tpu_custom_call.1} parent=19 // pred_check
          %p195 = pneg %p106
        $region26: #{tpu_custom_call.1} parent=19 // pred_check_branch
          %197 = sbr.rel (%p195) target = $region28
        $region27: #{tpu_custom_call.1} parent=19 // pred_region
          %s198 = sand.u32 %s16, 1
          %s199 = scalar_lea.sflag [#allocation4], %s198
          %s200 = sand.u32 %s96, 1
          %s201 = smul.addr %s200, 128
          %s202 = scalar_lea.vmem [#allocation8], %s201
          %s203 = smul.u32 16, %s25
          %205 = vsyncadd %s199, 0
          %s206 = smul.addr %s23, 16
          %s207 = sadd.s32 %s203, %s206
          %s208 = smul.addr %s207, 8
          %s209 = scalar_lea.hbm %s2, %s208
          %s210 = sshll.u32 %s209, 4
          %s211 = int_to_ptr.hbm [resolvable:$true] %s210
          %s212 = sshll.u32 %s202, 4
          %s213 = int_to_ptr.vmem [resolvable:$true] %s212
          %218 = dma.hbm_to_vmem [thread:$0]  %s211, 2048, %s213, %s199, 128, 128, 8
        $region28: #{tpu_custom_call.1} parent=19 // pred_fallthru
          _
      $region20: #{tpu_custom_call.1} parent=5 // pred_fallthru
        _
      %p219 = scmp.le.s32.totalorder 1, %s16
      %p220 = scmp.lt.s32.totalorder %s16, 3
      %p221 = pnand %p219, %p220
      %p222 = pneg %p221
      // Predicated region
      $region29: #{tpu_custom_call.1} parent=5 // pred_check
        _
      $region30: #{tpu_custom_call.1} parent=5 // pred_check_branch
        %224 = sbr.rel (%p221) target = $region32
      $region31: #{tpu_custom_call.1} parent=5 // pred_region
        %s225 = ssub.s32 %s16, 1
        %s226 = sand.u32 %s21, 1
        %s227 = scalar_lea.sflag [#allocation4], %s226
        %s228 = sand.u32 %s50, 1
        %s229 = smul.addr %s228, 8
        %s230 = scalar_lea.vmem [#allocation3], %s229
        // Predicated region
        $region33: #{tpu_custom_call.1} parent=31 // pred_check
          %p231 = pneg %p63
        $region34: #{tpu_custom_call.1} parent=31 // pred_check_branch
          %233 = sbr.rel (%p231) target = $region36
        $region35: #{tpu_custom_call.1} parent=31 // pred_region
          %235 = dma.done %s227, 128
        $region36: #{tpu_custom_call.1} parent=31 // pred_fallthru
          _
        // Predicated region
        $region37: #{tpu_custom_call.1} parent=31 // pred_check
          %p236 = pneg %p84
        $region38: #{tpu_custom_call.1} parent=31 // pred_check_branch
          %238 = sbr.rel (%p236) target = $region40
        $region39: #{tpu_custom_call.1} parent=31 // pred_region
          %240 = dma.done [#allocation7], 2048
        $region40: #{tpu_custom_call.1} parent=31 // pred_fallthru
          _
        %s241 = sand.u32 %s21, 1
        %s242 = scalar_lea.sflag [#allocation4], %s241
        %s243 = sand.u32 %s99, 1
        %s244 = smul.addr %s243, 128
        %s245 = scalar_lea.vmem [#allocation8], %s244
        // Predicated region
        $region41: #{tpu_custom_call.1} parent=31 // pred_check
          %p246 = pneg %p112
        $region42: #{tpu_custom_call.1} parent=31 // pred_check_branch
          %248 = sbr.rel (%p246) target = $region44
        $region43: #{tpu_custom_call.1} parent=31 // pred_region
          %250 = dma.done %s242, 2048
        $region44: #{tpu_custom_call.1} parent=31 // pred_fallthru
          _
        %s251 = sand.u32 %s21, 1
        %s252 = scalar_lea.sflag [#allocation4], %s251
        %s253 = sand.u32 %s50, 1
        %s254 = smul.addr %s253, 8
        %s255 = scalar_lea.vmem [#allocation3], %s254
        %p256 = pneg %p63
        %p257 = pneg %p60
        %p258 = pneg %p84
        %p259 = pneg %p81
        %s260 = sand.u32 %s21, 1
        %s261 = scalar_lea.sflag [#allocation4], %s260
        %s262 = sand.u32 %s99, 1
        %s263 = smul.addr %s262, 128
        %s264 = scalar_lea.vmem [#allocation8], %s263
        %p265 = pneg %p112
        %p266 = pneg %p109
        %p267 = pneg %p142
        %p268 = pneg %p139
        %s269 = sand.u32 %s129, 1
        %s270 = scalar_lea.sflag [#allocation5], %s269
        %s271 = sand.u32 %s129, 1
        %s272 = smul.addr %s271, 8
        %s273 = scalar_lea.vmem [#allocation9], %s272
        %s274 = smul.u32 16, %s28
        %p275 = scmp.eq.s32.totalorder %s28, 0
        // Predicated region
        $region45: #{tpu_custom_call.1} parent=31 // pred_check
          %p276 = pneg %p275
        $region46: #{tpu_custom_call.1} parent=31 // pred_check_branch
          %278 = sbr.rel (%p276) target = $region48
        $region47: #{tpu_custom_call.1} parent=31 // pred_region
          %v279 = vld [vmem:[%s230] sm:$0xff]
          %v280 = vld [vmem:[#allocation6] sm:$0xff]
          %v281 = vld [vmem:[#allocation6 + $0x8] sm:$0xff]
          %v282 = vld [vmem:[#allocation6 + $0x10] sm:$0xff]
          %v283 = vld [vmem:[#allocation6 + $0x18] sm:$0xff]
          %v284 = vld [vmem:[#allocation6 + $0x20] sm:$0xff]
          %v285 = vld [vmem:[#allocation6 + $0x28] sm:$0xff]
          %v286 = vld [vmem:[#allocation6 + $0x30] sm:$0xff]
          %v287 = vld [vmem:[#allocation6 + $0x38] sm:$0xff]
          %v288 = vld [vmem:[#allocation6 + $0x40] sm:$0xff]
          %v289 = vld [vmem:[#allocation6 + $0x48] sm:$0xff]
          %v290 = vld [vmem:[#allocation6 + $0x50] sm:$0xff]
          %v291 = vld [vmem:[#allocation6 + $0x58] sm:$0xff]
          %v292 = vld [vmem:[#allocation6 + $0x60] sm:$0xff]
          %v293 = vld [vmem:[#allocation6 + $0x68] sm:$0xff]
          %v294 = vld [vmem:[#allocation6 + $0x70] sm:$0xff]
          %v295 = vld [vmem:[#allocation6 + $0x78] sm:$0xff]
          %296 = vmatpush.msra.mxu0 %v295
          %297 = vmatpush.msra.mxu0 %v294
          %298 = vmatpush.msra.mxu0 %v293
          %299 = vmatpush.msra.mxu0 %v292
          %300 = vmatpush.msra.mxu0 %v291
          %301 = vmatpush.msra.mxu0 %v290
          %302 = vmatpush.msra.mxu0 %v289
          %303 = vmatpush.msra.mxu0 %v288
          %304 = vmatpush.msra.mxu0 %v287
          %305 = vmatpush.msra.mxu0 %v286
          %306 = vmatpush.msra.mxu0 %v285
          %307 = vmatpush.msra.mxu0 %v284
          %308 = vmatpush.msra.mxu0 %v283
          %309 = vmatpush.msra.mxu0 %v282
          %310 = vmatpush.msra.mxu0 %v281
          %311 = vmatpush.msra.mxu0 %v280
          %312 = vmatmul.f32.gmra.mxu0 %v279
          %v313 = vpop.f32.mrf.mxu0
          %v314 = vadd.f32 0.0, %v313
          %315 = vdwg.mxu0
          %316 = vst [vmem:[#allocation2] sm:$0xff] %v314
        $region48: #{tpu_custom_call.1} parent=31 // pred_fallthru
          _
        %v317 = vld [vmem:[#allocation2] sm:$0xff]
        %v318 = vld [vmem:[%s245] sm:$0xff]
        %v319 = vld [vmem:[%s245 + $0x8] sm:$0xff]
        %v320 = vld [vmem:[%s245 + $0x10] sm:$0xff]
        %v321 = vld [vmem:[%s245 + $0x18] sm:$0xff]
        %v322 = vld [vmem:[%s245 + $0x20] sm:$0xff]
        %v323 = vld [vmem:[%s245 + $0x28] sm:$0xff]
        %v324 = vld [vmem:[%s245 + $0x30] sm:$0xff]
        %v325 = vld [vmem:[%s245 + $0x38] sm:$0xff]
        %v326 = vld [vmem:[%s245 + $0x40] sm:$0xff]
        %v327 = vld [vmem:[%s245 + $0x48] sm:$0xff]
        %v328 = vld [vmem:[%s245 + $0x50] sm:$0xff]
        %v329 = vld [vmem:[%s245 + $0x58] sm:$0xff]
        %v330 = vld [vmem:[%s245 + $0x60] sm:$0xff]
        %v331 = vld [vmem:[%s245 + $0x68] sm:$0xff]
        %v332 = vld [vmem:[%s245 + $0x70] sm:$0xff]
        %v333 = vld [vmem:[%s245 + $0x78] sm:$0xff]
        %334 = vmatpush.xpose.msra.mxu0 %v333
        %335 = vmatpush.xpose.msra.mxu0 %v332
        %336 = vmatpush.xpose.msra.mxu0 %v331
        %337 = vmatpush.xpose.msra.mxu0 %v330
        %338 = vmatpush.xpose.msra.mxu0 %v329
        %339 = vmatpush.xpose.msra.mxu0 %v328
        %340 = vmatpush.xpose.msra.mxu0 %v327
        %341 = vmatpush.xpose.msra.mxu0 %v326
        %342 = vmatpush.xpose.msra.mxu0 %v325
        %343 = vmatpush.xpose.msra.mxu0 %v324
        %344 = vmatpush.xpose.msra.mxu0 %v323
        %345 = vmatpush.xpose.msra.mxu0 %v322
        %346 = vmatpush.xpose.msra.mxu0 %v321
        %347 = vmatpush.xpose.msra.mxu0 %v320
        %348 = vmatpush.xpose.msra.mxu0 %v319
        %349 = vmatpush.xpose.msra.mxu0 %v318
        %350 = vmatmul.f32.gmra.mxu0 %v317
        %v351 = vpop.f32.mrf.mxu0
        %v352 = vadd.f32 0.0, %v351
        %353 = vdwg.mxu0
        %354 = vst [vmem:[%s273] sm:$0xff] %v352
        %s355 = sand.u32 %s129, 1
        %s356 = scalar_lea.sflag [#allocation5], %s355
        %s357 = sand.u32 %s129, 1
        %s358 = smul.addr %s357, 8
        %s359 = scalar_lea.vmem [#allocation9], %s358
        // Predicated region
        $region49: #{tpu_custom_call.1} parent=31 // pred_check
          %p360 = pneg %p139
        $region50: #{tpu_custom_call.1} parent=31 // pred_check_branch
          %362 = sbr.rel (%p360) target = $region52
        $region51: #{tpu_custom_call.1} parent=31 // pred_region
          %364 = vsyncadd %s356, 0
          %s365 = sadd.s32 %s28, %s27
          %s366 = sadd.s32 %s365, %s26
          %s367 = smul.addr %s366, 8
          %s368 = scalar_lea.hbm %s3, %s367
          %s370 = sshll.u32 %s359, 4
          %s371 = int_to_ptr.vmem [resolvable:$true] %s370
          %s372 = sshll.u32 %s368, 4
          %s373 = int_to_ptr.hbm [resolvable:$true] %s372
          %375 = dma.vmem_to_hbm [thread:$0]  %s371, 128, %s373, %s356
        $region52: #{tpu_custom_call.1} parent=31 // pred_fallthru
          _
      $region32: #{tpu_custom_call.1} parent=5 // pred_fallthru
        _
      %p376 = scmp.le.s32.totalorder 2, %s16
      // Predicated region
      $region53: #{tpu_custom_call.1} parent=5 // pred_check
        %p377 = pneg %p376
      $region54: #{tpu_custom_call.1} parent=5 // pred_check_branch
        %379 = sbr.rel (%p377) target = $region56
      $region55: #{tpu_custom_call.1} parent=5 // pred_region
        %s380 = ssub.s32 %s16, 2
        // Predicated region
        $region57: #{tpu_custom_call.1} parent=55 // pred_check
          %p381 = pneg %p145
        $region58: #{tpu_custom_call.1} parent=55 // pred_check_branch
          %383 = sbr.rel (%p381) target = $region60
        $region59: #{tpu_custom_call.1} parent=55 // pred_region
          %s384 = sand.u32 %s130, 1
          %s385 = scalar_lea.sflag [#allocation5], %s384
          %s386 = sand.u32 %s130, 1
          %s387 = smul.addr %s386, 8
          %s388 = scalar_lea.vmem [#allocation9], %s387
          %390 = dma.done %s385, 128
        $region60: #{tpu_custom_call.1} parent=55 // pred_fallthru
          _
      $region56: #{tpu_custom_call.1} parent=5 // pred_fallthru
        _
    $region6: #{tpu_custom_call.1} parent=1 // loop_footer
      %s20 = sadd.s32 1, %s16
    $region7: #{tpu_custom_call.1} parent=1 // loop_footer_branch
      %15 = sbr.rel target = $region3
    $region8: #{tpu_custom_call.1} parent=1 // loop_exit
      _
    %391 = vsyncpa [#allocation4], 1
    %s392 = scalar_lea.sflag [#allocation4], 1
    %393 = vsyncpa %s392, 1
    %394 = vsyncpa [#allocation7], 1
    %395 = vsyncpa [#allocation5], 1
    %s396 = scalar_lea.sflag [#allocation5], 1
    %397 = vsyncpa %s396, 1

</llo_original>
